<compile_context>
chip_gen: v7x
topology: tpu7x:2x2x1
jax: 0.10.0
libtpu: 0.0.40
codegen_flags: <defaults>
</compile_context>

<pallas_src>
import functools
import math

import jax
import jax.numpy as jnp
from jax.experimental import pallas as pl
from jax.experimental.pallas import tpu as pltpu


# ----------------------------- tiling helpers ------------------------------

_ROW_PREF = 256                      # preferred rows per tile (sublane axis)
_VMEM_LIMIT = 48 * 1024 * 1024       # scoped-VMEM budget, fits v7x's 64 MiB


def _row_tiling(M):
    """Padded row count (multiple of 16, bf16 sublane packing) and row tile."""
    Mp = ((M + 15) // 16) * 16
    if Mp <= _ROW_PREF:
        return Mp, Mp
    t = _ROW_PREF
    while Mp % t != 0:
        t -= 16
    return Mp, t


def _pad_rows(x, Mp):
    M = x.shape[0]
    if Mp == M:
        return x
    return jnp.pad(x, ((0, Mp - M), (0, 0)))


def _cparams():
    return pltpu.CompilerParams(
        dimension_semantics=("parallel",),
        vmem_limit_bytes=_VMEM_LIMIT)


_INV_SQRT2 = 1.0 / math.sqrt(2.0)


# ----------------------------- Pallas kernels ------------------------------

def _dense_kernel(x_ref, w_ref, b_ref, o_ref, *, activation):
    """o = act(x @ w + b); full-K resident weight, f32 accumulation."""
    y = jnp.dot(x_ref[...], w_ref[...], preferred_element_type=jnp.float32)
    y = y + b_ref[...]
    if activation == "gelu":            # exact (erf) GELU, as in HF BERT
        y = 0.5 * y * (1.0 + jax.lax.erf(y * _INV_SQRT2))
    elif activation == "tanh":
        y = jnp.tanh(y)
    o_ref[...] = y.astype(o_ref.dtype)


def dense(x, w, b, activation="none", out_dtype=jnp.bfloat16):
    M, K = x.shape
    K2, N = w.shape
    assert K == K2
    Mp, tm = _row_tiling(M)
    xp = _pad_rows(x, Mp)
    kernel = functools.partial(_dense_kernel, activation=activation)
    out = pl.pallas_call(
        kernel,
        out_shape=jax.ShapeDtypeStruct((Mp, N), out_dtype),
        grid=(Mp // tm,),
        in_specs=[
            pl.BlockSpec((tm, K), lambda i: (i, 0)),
            pl.BlockSpec((K, N), lambda i: (0, 0)),     # resident weight
            pl.BlockSpec((1, N), lambda i: (0, 0)),
        ],
        out_specs=pl.BlockSpec((tm, N), lambda i: (i, 0)),
        compiler_params=_cparams(),
    )(xp, w, b.reshape(1, N).astype(jnp.float32))
    return out if Mp == M else out[:M]


def _dense_add_ln_kernel(x_ref, w_ref, b_ref, r_ref, g_ref, beta_ref, o_ref):
    """o = LayerNorm((x @ w + b) + residual) * gamma + beta, eps=1e-12."""
    y = jnp.dot(x_ref[...], w_ref[...], preferred_element_type=jnp.float32)
    y = y + b_ref[...] + r_ref[...].astype(jnp.float32)
    mean = jnp.mean(y, axis=-1, keepdims=True)
    yc = y - mean
    var = jnp.mean(yc * yc, axis=-1, keepdims=True)
    normed = yc * jax.lax.rsqrt(var + 1e-12)
    o_ref[...] = (normed * g_ref[...] + beta_ref[...]).astype(o_ref.dtype)


def dense_add_layernorm(x, w, b, res, gamma, beta, out_dtype=jnp.bfloat16):
    M, K = x.shape
    K2, N = w.shape
    assert K == K2 and res.shape == (M, N)
    Mp, tm = _row_tiling(M)
    xp = _pad_rows(x, Mp)
    rp = _pad_rows(res, Mp)
    out = pl.pallas_call(
        _dense_add_ln_kernel,
        out_shape=jax.ShapeDtypeStruct((Mp, N), out_dtype),
        grid=(Mp // tm,),
        in_specs=[
            pl.BlockSpec((tm, K), lambda i: (i, 0)),
            pl.BlockSpec((K, N), lambda i: (0, 0)),     # resident weight
            pl.BlockSpec((1, N), lambda i: (0, 0)),
            pl.BlockSpec((tm, N), lambda i: (i, 0)),
            pl.BlockSpec((1, N), lambda i: (0, 0)),
            pl.BlockSpec((1, N), lambda i: (0, 0)),
        ],
        out_specs=pl.BlockSpec((tm, N), lambda i: (i, 0)),
        compiler_params=_cparams(),
    )(xp, w, b.reshape(1, N).astype(jnp.float32), rp,
      gamma.reshape(1, N).astype(jnp.float32),
      beta.reshape(1, N).astype(jnp.float32))
    return out if Mp == M else out[:M]


def _ffn_ln_kernel(x_ref, wi_ref, bi_ref, wf_ref, bf_ref, g_ref, beta_ref,
                   o_ref):
    """Fused FFN: o = LN(gelu(x@wi+bi) @ wf + bf + x) * gamma + beta.
    The (tm, intermediate) activation never leaves VMEM."""
    x = x_ref[...]
    h = jnp.dot(x, wi_ref[...], preferred_element_type=jnp.float32)
    h = h + bi_ref[...]
    h = 0.5 * h * (1.0 + jax.lax.erf(h * _INV_SQRT2))
    y = jnp.dot(h.astype(jnp.bfloat16), wf_ref[...],
                preferred_element_type=jnp.float32)
    y = y + bf_ref[...] + x.astype(jnp.float32)          # residual = x
    mean = jnp.mean(y, axis=-1, keepdims=True)
    yc = y - mean
    var = jnp.mean(yc * yc, axis=-1, keepdims=True)
    normed = yc * jax.lax.rsqrt(var + 1e-12)
    o_ref[...] = (normed * g_ref[...] + beta_ref[...]).astype(o_ref.dtype)


def ffn_layernorm(x, wi, bi, wf, bf, gamma, beta, out_dtype=jnp.bfloat16):
    M, H = x.shape
    I = wi.shape[1]
    assert wf.shape == (I, H)
    Mp, tm = _row_tiling(M)
    xp = _pad_rows(x, Mp)
    out = pl.pallas_call(
        _ffn_ln_kernel,
        out_shape=jax.ShapeDtypeStruct((Mp, H), out_dtype),
        grid=(Mp // tm,),
        in_specs=[
            pl.BlockSpec((tm, H), lambda i: (i, 0)),
            pl.BlockSpec((H, I), lambda i: (0, 0)),      # resident wi
            pl.BlockSpec((1, I), lambda i: (0, 0)),
            pl.BlockSpec((I, H), lambda i: (0, 0)),      # resident wf
            pl.BlockSpec((1, H), lambda i: (0, 0)),
            pl.BlockSpec((1, H), lambda i: (0, 0)),
            pl.BlockSpec((1, H), lambda i: (0, 0)),
        ],
        out_specs=pl.BlockSpec((tm, H), lambda i: (i, 0)),
        compiler_params=_cparams(),
    )(xp, wi, bi.reshape(1, I).astype(jnp.float32), wf,
      bf.reshape(1, H).astype(jnp.float32),
      gamma.reshape(1, H).astype(jnp.float32),
      beta.reshape(1, H).astype(jnp.float32))
    return out if Mp == M else out[:M]


def _embed_ln_kernel(we_ref, pt_ref, g_ref, b_ref, o_ref):
    """Fused embedding sum + LayerNorm: o = LN(word + (pos+type)) per token."""
    x = we_ref[0].astype(jnp.float32) + pt_ref[...]
    mean = jnp.mean(x, axis=-1, keepdims=True)
    xc = x - mean
    var = jnp.mean(xc * xc, axis=-1, keepdims=True)
    y = xc * jax.lax.rsqrt(var + 1e-12)
    o_ref[0] = (y * g_ref[...] + b_ref[...]).astype(o_ref.dtype)


def embed_layernorm(we, pt, gamma, beta, out_dtype=jnp.bfloat16):
    B, S, H = we.shape
    return pl.pallas_call(
        _embed_ln_kernel,
        out_shape=jax.ShapeDtypeStruct((B, S, H), out_dtype),
        grid=(B,),
        in_specs=[
            pl.BlockSpec((1, S, H), lambda b: (b, 0, 0)),
            pl.BlockSpec((S, H), lambda b: (0, 0)),
            pl.BlockSpec((1, H), lambda b: (0, 0)),
            pl.BlockSpec((1, H), lambda b: (0, 0)),
        ],
        out_specs=pl.BlockSpec((1, S, H), lambda b: (b, 0, 0)),
        compiler_params=_cparams(),
    )(we, pt.astype(jnp.float32),
      gamma.reshape(1, H).astype(jnp.float32),
      beta.reshape(1, H).astype(jnp.float32))


def _mha_kernel(qkv_ref, bias_ref, o_ref, *, num_heads, head_dim, hidden):
    """One batch element, all heads.  qkv block: (1, S, 3H) with the
    1/sqrt(D) scale already folded into the Q projection weights.
    Each head's context is stored directly into its lane slice of o_ref."""
    qkv = qkv_ref[0]          # (S, 3H) bf16
    bias = bias_ref[0]        # (1, S)  f32 additive mask bias
    for h in range(num_heads):
        lo = h * head_dim
        q = qkv[:, lo:lo + head_dim]                                # (S, D)
        k = qkv[:, hidden + lo:hidden + lo + head_dim]              # (S, D)
        v = qkv[:, 2 * hidden + lo:2 * hidden + lo + head_dim]      # (S, D)
        s = jax.lax.dot_general(q, k, (((1,), (1,)), ((), ())),
                                preferred_element_type=jnp.float32)
        s = s + bias
        s = s - jnp.max(s, axis=-1, keepdims=True)
        p = jnp.exp(s)
        denom = jnp.sum(p, axis=-1, keepdims=True)
        p = p * pl.reciprocal(denom, approx=True)
        ctx = jnp.dot(p.astype(jnp.bfloat16), v,
                      preferred_element_type=jnp.float32)
        o_ref[0, :, lo:lo + head_dim] = ctx.astype(o_ref.dtype)


def attention(qkv, bias, num_heads, head_dim):
    # TODO(synk): add a q-block grid axis for very long sequences (S >> 512)
    # so (S, S) f32 scores per head stay bounded in VMEM.
    B, S, threeH = qkv.shape
    H = threeH // 3
    kernel = functools.partial(_mha_kernel, num_heads=num_heads,
                               head_dim=head_dim, hidden=H)
    return pl.pallas_call(
        kernel,
        out_shape=jax.ShapeDtypeStruct((B, S, H), jnp.bfloat16),
        grid=(B,),
        in_specs=[
            pl.BlockSpec((1, S, threeH), lambda i: (i, 0, 0)),
            pl.BlockSpec((1, 1, S), lambda i: (i, 0, 0)),
        ],
        out_specs=pl.BlockSpec((1, S, H), lambda i: (i, 0, 0)),
        compiler_params=_cparams(),
    )(qkv, bias)


def _head_kernel(x_ref, pw_ref, pb_ref, cw_ref, cb_ref, o_ref):
    """Fused pooler (tanh) + classification head: logits = tanh(x@pw+pb)@cw+cb."""
    pooled = jnp.dot(x_ref[...], pw_ref[...],
                     preferred_element_type=jnp.float32) + pb_ref[...]
    pooled = jnp.tanh(pooled)
    logits = jnp.dot(pooled.astype(jnp.bfloat16), cw_ref[...],
                     preferred_element_type=jnp.float32) + cb_ref[...]
    o_ref[...] = logits


def pooler_classifier_head(cls_tok, pw, pb, cw, cb):
    B, H = cls_tok.shape
    N = cw.shape[1]
    return pl.pallas_call(
        _head_kernel,
        out_shape=jax.ShapeDtypeStruct((B, N), jnp.float32),
    )(cls_tok, pw, pb.reshape(1, H).astype(jnp.float32),
      cw, cb.reshape(1, N).astype(jnp.float32))


# --------------------------- parameter construction ------------------------

def init_params(key, *, vocab_size, max_pos, type_vocab, hidden, num_heads,
                intermediate, num_layers, num_labels):
    keys = iter(jax.random.split(key, 16 + 16 * num_layers))

    def nrm(shape):
        return 0.02 * jax.random.normal(next(keys), shape, jnp.float32)

    params = {
        "word_emb": nrm((vocab_size, hidden)),
        "pos_emb": nrm((max_pos, hidden)),
        "type_emb": nrm((type_vocab, hidden)),
        "emb_ln_g": jnp.ones((hidden,), jnp.float32),
        "emb_ln_b": jnp.zeros((hidden,), jnp.float32),
        "pooler_w": nrm((hidden, hidden)),
        "pooler_b": jnp.zeros((hidden,), jnp.float32),
        "cls_w": nrm((hidden, num_labels)),
        "cls_b": jnp.zeros((num_labels,), jnp.float32),
        "layers": [],
    }
    for _ in range(num_layers):
        params["layers"].append({
            "wq": nrm((hidden, hidden)), "bq": jnp.zeros((hidden,), jnp.float32),
            "wk": nrm((hidden, hidden)), "bk": jnp.zeros((hidden,), jnp.float32),
            "wv": nrm((hidden, hidden)), "bv": jnp.zeros((hidden,), jnp.float32),
            "wo": nrm((hidden, hidden)), "bo": jnp.zeros((hidden,), jnp.float32),
            "ln1_g": jnp.ones((hidden,), jnp.float32),
            "ln1_b": jnp.zeros((hidden,), jnp.float32),
            "wi": nrm((hidden, intermediate)),
            "bi": jnp.zeros((intermediate,), jnp.float32),
            "wf": nrm((intermediate, hidden)),
            "bf": jnp.zeros((hidden,), jnp.float32),
            "ln2_g": jnp.ones((hidden,), jnp.float32),
            "ln2_b": jnp.zeros((hidden,), jnp.float32),
        })
    return params


def prepare_inference_params(params, *, num_heads):
    """bf16 MXU weights, fused QKV weight, 1/sqrt(D) folded into Q."""
    hidden = params["word_emb"].shape[1]
    scale = 1.0 / math.sqrt(hidden // num_heads)
    bf = lambda a: a.astype(jnp.bfloat16)
    out = {
        "word_emb": params["word_emb"],
        "pos_emb": params["pos_emb"],
        "type_emb": params["type_emb"],
        "emb_ln_g": params["emb_ln_g"], "emb_ln_b": params["emb_ln_b"],
        "pooler_w": bf(params["pooler_w"]), "pooler_b": params["pooler_b"],
        "cls_w": bf(params["cls_w"]), "cls_b": params["cls_b"],
        "layers": [],
    }
    for lyr in params["layers"]:
        wqkv = jnp.concatenate(
            [lyr["wq"] * scale, lyr["wk"], lyr["wv"]], axis=1)
        bqkv = jnp.concatenate([lyr["bq"] * scale, lyr["bk"], lyr["bv"]])
        out["layers"].append({
            "wqkv": bf(wqkv), "bqkv": bqkv,
            "wo": bf(lyr["wo"]), "bo": lyr["bo"],
            "ln1_g": lyr["ln1_g"], "ln1_b": lyr["ln1_b"],
            "wi": bf(lyr["wi"]), "bi": lyr["bi"],
            "wf": bf(lyr["wf"]), "bf": lyr["bf"],
            "ln2_g": lyr["ln2_g"], "ln2_b": lyr["ln2_b"],
        })
    return out


# ------------------------------- forward pass -------------------------------

def bert_classifier_forward(params, input_ids, attention_mask, *, num_heads):
    """Mirrors BertForSequenceClassification(input_ids, attention_mask).logits."""
    B, S = input_ids.shape
    H = params["word_emb"].shape[1]
    D = H // num_heads

    # Embedding gathers are plain-JAX glue; the (word+pos+type) sum and the
    # embedding LayerNorm are fused into a single Pallas kernel.
    we = jnp.take(params["word_emb"], input_ids, axis=0)          # (B, S, H) f32
    pt = params["pos_emb"][:S] + params["type_emb"][0][None, :]   # token_type_ids = 0
    x = embed_layernorm(we, pt, params["emb_ln_g"], params["emb_ln_b"])
    x = x.reshape(B * S, H)                                       # bf16 [B*S, H]
    # TODO(synk): dropout layers are skipped (inference semantics, p -> identity).

    # Additive attention-mask bias, one copy per batch element: (B, 1, S)
    mask = attention_mask.astype(jnp.float32)
    bias = ((1.0 - mask) * -10000.0)[:, None, :]

    for layer in params["layers"]:
        qkv = dense(x, layer["wqkv"], layer["bqkv"])              # [B*S, 3H] bf16
        ctx = attention(qkv.reshape(B, S, 3 * H), bias, num_heads, D)
        x = dense_add_layernorm(ctx.reshape(B * S, H), layer["wo"], layer["bo"],
                                x, layer["ln1_g"], layer["ln1_b"])
        x = ffn_layernorm(x, layer["wi"], layer["bi"], layer["wf"], layer["bf"],
                          layer["ln2_g"], layer["ln2_b"])

    # Fused pooler (tanh on [CLS]) + classification head -> logits (B, 2)
    cls_tok = x.reshape(B, S, H)[:, 0, :]
    logits = pooler_classifier_head(cls_tok, params["pooler_w"],
                                    params["pooler_b"], params["cls_w"],
                                    params["cls_b"])
    return logits


# ----------------------------------- main -----------------------------------

if __name__ == "__main__":
    B, S, H, NUM_HEADS, INTER, LAYERS, VOCAB = 2, 8, 32, 2, 64, 2, 128

    key = jax.random.PRNGKey(0)
    k_params, k_ids = jax.random.split(key)

    raw_params = init_params(
        k_params, vocab_size=VOCAB, max_pos=16, type_vocab=2, hidden=H,
        num_heads=NUM_HEADS, intermediate=INTER, num_layers=LAYERS, num_labels=2)
    params = prepare_inference_params(raw_params, num_heads=NUM_HEADS)

    input_ids = jax.random.randint(k_ids, (B, S), 0, VOCAB, dtype=jnp.int32)
    attention_mask = jnp.ones((B, S), dtype=jnp.int32).at[1, 6:].set(0)

    logits = bert_classifier_forward(params, input_ids, attention_mask,
                                     num_heads=NUM_HEADS)
    logits = jax.block_until_ready(logits)
    assert logits.shape == (B, 2) and logits.dtype == jnp.float32
    print("KERNEL_OK")
</pallas_src>

<mosaic_0001>
module attributes {stable_mosaic.version = 11 : i64} {
  func.func @_embed_ln_kernel(%arg0: i32, %arg1: memref<1x8x32xf32, #tpu.memory_space<vmem>>, %arg2: memref<8x32xf32, #tpu.memory_space<vmem>>, %arg3: memref<1x32xf32, #tpu.memory_space<vmem>>, %arg4: memref<1x32xf32, #tpu.memory_space<vmem>>, %arg5: memref<1x8x32xbf16, #tpu.memory_space<vmem>>) attributes {dimension_semantics = [#tpu.dimension_semantics<parallel>], iteration_bounds = array<i64: 2>, scalar_prefetch = 0 : i64, scratch_operands = 0 : i64, tpu.core_type = #tpu.core_type<tc>, window_params = [{transform_indices = @transform_0, window_bounds = array<i64: 1, 8, 32>}, {pipeline_mode = #tpu.pipeline_mode<synchronous>, transform_indices = @transform_1, window_bounds = array<i64: 8, 32>}, {pipeline_mode = #tpu.pipeline_mode<synchronous>, transform_indices = @transform_2, window_bounds = array<i64: 1, 32>}, {pipeline_mode = #tpu.pipeline_mode<synchronous>, transform_indices = @transform_3, window_bounds = array<i64: 1, 32>}, {transform_indices = @transform_4, window_bounds = array<i64: 1, 8, 32>}]} {
    %c0 = arith.constant 0 : index
    %c0_0 = arith.constant 0 : index
    %c0_1 = arith.constant 0 : index
    %0 = vector.load %arg1[%c0, %c0_0, %c0_1] : memref<1x8x32xf32, #tpu.memory_space<vmem>>, vector<1x8x32xf32>
    %1 = vector.shape_cast %0 : vector<1x8x32xf32> to vector<8x32xf32>
    %c0_2 = arith.constant 0 : index
    %c0_3 = arith.constant 0 : index
    %2 = vector.load %arg2[%c0_2, %c0_3] : memref<8x32xf32, #tpu.memory_space<vmem>>, vector<8x32xf32>
    %3 = arith.addf %1, %2 : vector<8x32xf32>
    %cst = arith.constant dense<0.000000e+00> : vector<8xf32>
    %4 = vector.multi_reduction <add>, %3, %cst [1] : vector<8x32xf32> to vector<8xf32>
    %5 = vector.shape_cast %4 : vector<8xf32> to vector<8x1xf32>
    %cst_4 = arith.constant 3.200000e+01 : f32
    %6 = vector.broadcast %cst_4 : f32 to vector<8x1xf32>
    %7 = arith.divf %5, %6 : vector<8x1xf32>
    %8 = vector.broadcast %7 : vector<8x1xf32> to vector<8x32xf32>
    %9 = arith.subf %3, %8 : vector<8x32xf32>
    %10 = arith.mulf %9, %9 : vector<8x32xf32>
    %cst_5 = arith.constant dense<0.000000e+00> : vector<8xf32>
    %11 = vector.multi_reduction <add>, %10, %cst_5 [1] : vector<8x32xf32> to vector<8xf32>
    %12 = vector.shape_cast %11 : vector<8xf32> to vector<8x1xf32>
    %cst_6 = arith.constant 3.200000e+01 : f32
    %13 = vector.broadcast %cst_6 : f32 to vector<8x1xf32>
    %14 = arith.divf %12, %13 : vector<8x1xf32>
    %cst_7 = arith.constant 9.99999996E-13 : f32
    %15 = vector.broadcast %cst_7 : f32 to vector<8x1xf32>
    %16 = arith.addf %14, %15 : vector<8x1xf32>
    %17 = math.rsqrt %16 : vector<8x1xf32>
    %18 = vector.broadcast %17 : vector<8x1xf32> to vector<8x32xf32>
    %19 = arith.mulf %9, %18 : vector<8x32xf32>
    %c0_8 = arith.constant 0 : index
    %c0_9 = arith.constant 0 : index
    %20 = vector.load %arg3[%c0_8, %c0_9] : memref<1x32xf32, #tpu.memory_space<vmem>>, vector<1x32xf32>
    %21 = vector.broadcast %20 : vector<1x32xf32> to vector<8x32xf32>
    %22 = arith.mulf %19, %21 : vector<8x32xf32>
    %c0_10 = arith.constant 0 : index
    %c0_11 = arith.constant 0 : index
    %23 = vector.load %arg4[%c0_10, %c0_11] : memref<1x32xf32, #tpu.memory_space<vmem>>, vector<1x32xf32>
    %24 = vector.broadcast %23 : vector<1x32xf32> to vector<8x32xf32>
    %25 = arith.addf %22, %24 : vector<8x32xf32>
    %26 = arith.truncf %25 : vector<8x32xf32> to vector<8x32xbf16>
    %c0_12 = arith.constant 0 : index
    %c0_13 = arith.constant 0 : index
    %c0_14 = arith.constant 0 : index
    %27 = vector.load %arg5[%c0_12, %c0_13, %c0_14] : memref<1x8x32xbf16, #tpu.memory_space<vmem>>, vector<1x8x32xbf16>
    %28 = vector.shape_cast %27 : vector<1x8x32xbf16> to vector<8x32xbf16>
    %29 = vector.shape_cast %26 : vector<8x32xbf16> to vector<1x8x32xbf16>
    tpu.vector_store %arg5[%c0_12, %c0_13, %c0_14], %29 {strides = array<i32>} : memref<1x8x32xbf16, #tpu.memory_space<vmem>>, vector<1x8x32xbf16>,
    return
  }
  func.func @transform_0(%arg0: i32) -> (i32, i32, i32) {
    %c0_i32 = arith.constant 0 : i32
    %c0_i32_0 = arith.constant 0 : i32
    %c0_i32_1 = arith.constant 0 : i32
    return %arg0, %c0_i32, %c0_i32_0 : i32, i32, i32
  }
  func.func @transform_1(%arg0: i32) -> (i32, i32) {
    %c0_i32 = arith.constant 0 : i32
    %c0_i32_0 = arith.constant 0 : i32
    %c0_i32_1 = arith.constant 0 : i32
    return %c0_i32, %c0_i32_0 : i32, i32
  }
  func.func @transform_2(%arg0: i32) -> (i32, i32) {
    %c0_i32 = arith.constant 0 : i32
    %c0_i32_0 = arith.constant 0 : i32
    %c0_i32_1 = arith.constant 0 : i32
    return %c0_i32, %c0_i32_0 : i32, i32
  }
  func.func @transform_3(%arg0: i32) -> (i32, i32) {
    %c0_i32 = arith.constant 0 : i32
    %c0_i32_0 = arith.constant 0 : i32
    %c0_i32_1 = arith.constant 0 : i32
    return %c0_i32, %c0_i32_0 : i32, i32
  }
  func.func @transform_4(%arg0: i32) -> (i32, i32, i32) {
    %c0_i32 = arith.constant 0 : i32
    %c0_i32_0 = arith.constant 0 : i32
    %c0_i32_1 = arith.constant 0 : i32
    return %arg0, %c0_i32, %c0_i32_0 : i32, i32, i32
  }
}

</mosaic_0001>

<llo_original>
// kernel: tpu_custom_call.1
$region0: #{tpu_custom_call.1}
  #allocation0 [shape = 'u32[]', space=smem, size = 0x4, offset = 0x4, fixed_abs, tag = 'smem constant byte address 0x4 - core index']
  #allocation1 [shape = 'u32[144,128]{1,0:T(1,128)}', space=vmem, size = 0x12000, scoped, tag = 'internal scratch']
  %s0 = inlined_call_operand.hbm [shape: f32[2,8,32], index: 0, kind: input, shape index: {}]
  %s1 = inlined_call_operand.hbm [shape: f32[8,32], index: 1, kind: input, shape index: {}]
  %s2 = inlined_call_operand.vmem [shape: f32[1,32], index: 2, kind: input, shape index: {}]
  %s3 = inlined_call_operand.vmem [shape: f32[1,32], index: 3, kind: input, shape index: {}]
  %s4 = inlined_call_operand.hbm [shape: bf16[2,8,32], index: 4, kind: output, shape index: {}]
  %s5 = sld [smem:[#allocation0]]
  $region57: #{tpu_custom_call.1} parent=0
    _
  %s7 = ssub.s32 1, %s5
  %s8 = scalar_select 0, %s7, %s5
  $region1: #{tpu_custom_call.1} parent=0
    #allocation2 [shape = 'u8[8192]{0}', space=vmem, size = 0x2000, scoped, tag = 'input window, operand 0']
    #allocation3 [shape = 's32[2]{0}', space=sflag, size = 0x8, scoped, tag = 'scoped memory for tpu_custom_call.1']
    #allocation4 [shape = 's32[2]{0}', space=sflag, size = 0x8, scoped, tag = 'scoped memory for tpu_custom_call.1']
    #allocation5 [shape = 'u8[4096]{0}', space=vmem, size = 0x1000, scoped, tag = 'input window, operand 1, single buffered']
    #allocation6 [shape = 's32[1]{0}', space=sflag, size = 0x4, scoped, tag = 'scoped memory for tpu_custom_call.1']
    #allocation7 [shape = 'u8[4096]{0}', space=vmem, size = 0x1000, scoped, tag = 'output window, operand 0']
    %9 = vsyncpa [#allocation3], 0
    %s10 = scalar_lea.sflag [#allocation3], 1
    %11 = vsyncpa %s10, 0
    %12 = vsyncpa [#allocation6], 0
    %13 = vsyncpa [#allocation4], 0
    %s14 = scalar_lea.sflag [#allocation4], 1
    %15 = vsyncpa %s14, 0
    loop: start=0, step=1, limit=4
    $region2: #{tpu_custom_call.1} parent=1 // loop_pre_header
      _
    $region3: #{tpu_custom_call.1} parent=1 // loop_header
      %s17 = sphi 0, %s21
      %p18 = scmp.ge.s32.totalorder %s17, 4
      %s27 = sphi 0, %s29
      %s30 = sphi 0, %s27
      %s31 = sphi 0, %s30
      %s47 = sphi 0, %s31
      %s51 = sphi 0, %s51
      %s53 = sphi 0, %s51
      %s54 = sphi 0, %s53
      %s68 = sphi 0, %s54
      %s72 = sphi 0, %s72
      %s74 = sphi 0, %s72
      %s75 = sphi 0, %s74
      %s89 = sphi 0, %s75
      %s93 = sphi 0, %s93
      %s95 = sphi 0, %s93
      %s96 = sphi 0, %s95
      %s110 = sphi 0, %s96
      %s116 = sphi 0, %s118
      %s119 = sphi 0, %s116
      %s120 = sphi 0, %s119
      %s136 = sphi 0, %s120
    $region4: #{tpu_custom_call.1} parent=1 // loop_header_branch
      %20 = sbr.rel (%p18) target = $region8
    $region5: #{tpu_custom_call.1} parent=1 // loop_body
      %s22 = ssub.s32 %s17, 1
      %s23 = ssub.s32 %s17, 2
      %s24 = sadd.s32 %s17, 1
      %s25 = ssub.s32 %s17, %s24
      %p26 = scmp.eq.s32.totalorder %s25, 0
      %s28 = sadd.s32 %s27, 1
      %s29 = scalar_select %p26, %s27, %s28
      %p32 = pneg %p26
      %p33 = scmp.eq.s32.totalorder %s17, 1
      %p34 = por %p32, %p33
      %p35 = scmp.ne.s32.totalorder %s27, %s30
      %p36 = scmp.eq.s32.totalorder %s17, 0
      %p37 = por %p35, %p36
      %p38 = scmp.ne.s32.totalorder %s27, %s30
      %p39 = scmp.eq.s32.totalorder %s22, 1
      %p40 = por %p38, %p39
      %p41 = scmp.ne.s32.totalorder %s30, %s31
      %p42 = scmp.eq.s32.totalorder %s22, 0
      %p43 = por %p41, %p42
      %p44 = scmp.ne.s32.totalorder %s30, %s31
      %p45 = scmp.eq.s32.totalorder %s23, 1
      %p46 = por %p44, %p45
      %p48 = scmp.ne.s32.totalorder %s31, %s47
      %p49 = scmp.eq.s32.totalorder %s23, 0
      %p50 = por %p48, %p49
      %s52 = sadd.s32 %s51, 1
      %p55 = scmp.eq.s32.totalorder %s17, 1
      %p56 = scmp.ne.s32.totalorder %s51, %s53
      %p57 = scmp.eq.s32.totalorder %s17, 0
      %p58 = por %p56, %p57
      %p59 = scmp.ne.s32.totalorder %s51, %s53
      %p60 = scmp.eq.s32.totalorder %s22, 1
      %p61 = por %p59, %p60
      %p62 = scmp.ne.s32.totalorder %s53, %s54
      %p63 = scmp.eq.s32.totalorder %s22, 0
      %p64 = por %p62, %p63
      %p65 = scmp.ne.s32.totalorder %s53, %s54
      %p66 = scmp.eq.s32.totalorder %s23, 1
      %p67 = por %p65, %p66
      %p69 = scmp.ne.s32.totalorder %s54, %s68
      %p70 = scmp.eq.s32.totalorder %s23, 0
      %p71 = por %p69, %p70
      %s73 = sadd.s32 %s72, 1
      %p76 = scmp.eq.s32.totalorder %s17, 1
      %p77 = scmp.ne.s32.totalorder %s72, %s74
      %p78 = scmp.eq.s32.totalorder %s17, 0
      %p79 = por %p77, %p78
      %p80 = scmp.ne.s32.totalorder %s72, %s74
      %p81 = scmp.eq.s32.totalorder %s22, 1
      %p82 = por %p80, %p81
      %p83 = scmp.ne.s32.totalorder %s74, %s75
      %p84 = scmp.eq.s32.totalorder %s22, 0
      %p85 = por %p83, %p84
      %p86 = scmp.ne.s32.totalorder %s74, %s75
      %p87 = scmp.eq.s32.totalorder %s23, 1
      %p88 = por %p86, %p87
      %p90 = scmp.ne.s32.totalorder %s75, %s89
      %p91 = scmp.eq.s32.totalorder %s23, 0
      %p92 = por %p90, %p91
      %s94 = sadd.s32 %s93, 1
      %p97 = scmp.eq.s32.totalorder %s17, 1
      %p98 = scmp.ne.s32.totalorder %s93, %s95
      %p99 = scmp.eq.s32.totalorder %s17, 0
      %p100 = por %p98, %p99
      %p101 = scmp.ne.s32.totalorder %s93, %s95
      %p102 = scmp.eq.s32.totalorder %s22, 1
      %p103 = por %p101, %p102
      %p104 = scmp.ne.s32.totalorder %s95, %s96
      %p105 = scmp.eq.s32.totalorder %s22, 0
      %p106 = por %p104, %p105
      %p107 = scmp.ne.s32.totalorder %s95, %s96
      %p108 = scmp.eq.s32.totalorder %s23, 1
      %p109 = por %p107, %p108
      %p111 = scmp.ne.s32.totalorder %s96, %s110
      %p112 = scmp.eq.s32.totalorder %s23, 0
      %p113 = por %p111, %p112
      %s114 = ssub.s32 %s17, %s24
      %p115 = scmp.eq.s32.totalorder %s114, 0
      %s117 = sadd.s32 %s116, 1
      %s118 = scalar_select %p115, %s116, %s117
      %p121 = pneg %p115
      %p122 = scmp.eq.s32.totalorder %s17, 1
      %p123 = por %p121, %p122
      %p124 = scmp.ne.s32.totalorder %s116, %s119
      %p125 = scmp.eq.s32.totalorder %s17, 0
      %p126 = por %p124, %p125
      %p127 = scmp.ne.s32.totalorder %s116, %s119
      %p128 = scmp.eq.s32.totalorder %s22, 1
      %p129 = por %p127, %p128
      %p130 = scmp.ne.s32.totalorder %s119, %s120
      %p131 = scmp.eq.s32.totalorder %s22, 0
      %p132 = por %p130, %p131
      %p133 = scmp.ne.s32.totalorder %s119, %s120
      %p134 = scmp.eq.s32.totalorder %s23, 1
      %p135 = por %p133, %p134
      %p137 = scmp.ne.s32.totalorder %s120, %s136
      %p138 = scmp.eq.s32.totalorder %s23, 0
      %p139 = por %p137, %p138
      %p140 = scmp.le.s32.totalorder 1, %s17
      %p141 = scmp.lt.s32.totalorder %s17, 3
      %p142 = pnand %p140, %p141
      %p143 = pneg %p142
      // Predicated region
      $region9: #{tpu_custom_call.1} parent=5 // pred_check
        _
      $region10: #{tpu_custom_call.1} parent=5 // pred_check_branch
        %145 = sbr.rel (%p142) target = $region12
      $region11: #{tpu_custom_call.1} parent=5 // pred_region
        %s146 = ssub.s32 %s17, 1
        // Predicated region
        $region13: #{tpu_custom_call.1} parent=11 // pred_check
          %p147 = pneg %p64
        $region14: #{tpu_custom_call.1} parent=11 // pred_check_branch
          %149 = sbr.rel (%p147) target = $region16
        $region15: #{tpu_custom_call.1} parent=11 // pred_region
          %s151 = ssub.s32 128, 128
          %152 = vsyncadd [#allocation6], %s151
          %s154 = sshll.u32 [#allocation5], 4
          %s155 = int_to_ptr.vmem [resolvable:$true] %s154
          %157 = dma.hbm_to_vmem [thread:$0]  %s1, 128, %s155, [#allocation6]
        $region16: #{tpu_custom_call.1} parent=11 // pred_fallthru
          _
        // Predicated region
        $region17: #{tpu_custom_call.1} parent=11 // pred_check
          %p158 = pneg %p85
        $region18: #{tpu_custom_call.1} parent=11 // pred_check_branch
          %160 = sbr.rel (%p158) target = $region20
        $region19: #{tpu_custom_call.1} parent=11 // pred_region
          _
        $region20: #{tpu_custom_call.1} parent=11 // pred_fallthru
          _
        // Predicated region
        $region21: #{tpu_custom_call.1} parent=11 // pred_check
          %p161 = pneg %p106
        $region22: #{tpu_custom_call.1} parent=11 // pred_check_branch
          %163 = sbr.rel (%p161) target = $region24
        $region23: #{tpu_custom_call.1} parent=11 // pred_region
          _
        $region24: #{tpu_custom_call.1} parent=11 // pred_fallthru
          _
      $region12: #{tpu_custom_call.1} parent=5 // pred_fallthru
        _
      %p164 = scmp.lt.s32.totalorder %s17, 2
      // Predicated region
      $region25: #{tpu_custom_call.1} parent=5 // pred_check
        %p165 = pneg %p164
      $region26: #{tpu_custom_call.1} parent=5 // pred_check_branch
        %167 = sbr.rel (%p165) target = $region28
      $region27: #{tpu_custom_call.1} parent=5 // pred_region
        // Predicated region
        $region29: #{tpu_custom_call.1} parent=27 // pred_check
          %p168 = pneg %p37
        $region30: #{tpu_custom_call.1} parent=27 // pred_check_branch
          %170 = sbr.rel (%p168) target = $region32
        $region31: #{tpu_custom_call.1} parent=27 // pred_region
          %s171 = sand.u32 %s27, 1
          %s172 = scalar_lea.sflag [#allocation3], %s171
          %s173 = sand.u32 %s27, 1
          %s174 = smul.addr %s173, 8
          %s175 = scalar_lea.vmem [#allocation2], %s174
          %s177 = ssub.s32 128, 128
          %178 = vsyncadd %s172, %s177
          %s179 = smul.addr %s17, 128
          %s180 = scalar_lea.hbm %s0, %s179
          %s182 = sshll.u32 %s175, 4
          %s183 = int_to_ptr.vmem [resolvable:$true] %s182
          %185 = dma.hbm_to_vmem [thread:$0]  %s180, 128, %s183, %s172
        $region32: #{tpu_custom_call.1} parent=27 // pred_fallthru
          _
      $region28: #{tpu_custom_call.1} parent=5 // pred_fallthru
        _
      %p186 = scmp.le.s32.totalorder 1, %s17
      %p187 = scmp.lt.s32.totalorder %s17, 3
      %p188 = pnand %p186, %p187
      %p189 = pneg %p188
      // Predicated region
      $region33: #{tpu_custom_call.1} parent=5 // pred_check
        _
      $region34: #{tpu_custom_call.1} parent=5 // pred_check_branch
        %191 = sbr.rel (%p188) target = $region36
      $region35: #{tpu_custom_call.1} parent=5 // pred_region
        %s192 = ssub.s32 %s17, 1
        %s193 = sand.u32 %s30, 1
        %s194 = scalar_lea.sflag [#allocation3], %s193
        %s195 = sand.u32 %s30, 1
        %s196 = smul.addr %s195, 8
        %s197 = scalar_lea.vmem [#allocation2], %s196
        // Predicated region
        $region37: #{tpu_custom_call.1} parent=35 // pred_check
          %p198 = pneg %p43
        $region38: #{tpu_custom_call.1} parent=35 // pred_check_branch
          %200 = sbr.rel (%p198) target = $region40
        $region39: #{tpu_custom_call.1} parent=35 // pred_region
          %201 = dma.done %s194, 128
        $region40: #{tpu_custom_call.1} parent=35 // pred_fallthru
          _
        // Predicated region
        $region41: #{tpu_custom_call.1} parent=35 // pred_check
          %p202 = pneg %p64
        $region42: #{tpu_custom_call.1} parent=35 // pred_check_branch
          %204 = sbr.rel (%p202) target = $region44
        $region43: #{tpu_custom_call.1} parent=35 // pred_region
          %205 = dma.done [#allocation6], 128
        $region44: #{tpu_custom_call.1} parent=35 // pred_fallthru
          _
        %s206 = sand.u32 %s30, 1
        %s207 = scalar_lea.sflag [#allocation3], %s206
        %s208 = sand.u32 %s30, 1
        %s209 = smul.addr %s208, 8
        %s210 = scalar_lea.vmem [#allocation2], %s209
        %p211 = pneg %p43
        %p212 = pneg %p40
        %p213 = pneg %p64
        %p214 = pneg %p61
        %p215 = pneg %p85
        %p216 = pneg %p82
        %p217 = pneg %p106
        %p218 = pneg %p103
        %p219 = pneg %p132
        %p220 = pneg %p129
        %s221 = sand.u32 %s119, 1
        %s222 = scalar_lea.sflag [#allocation4], %s221
        %s223 = sand.u32 %s119, 1
        %s224 = smul.addr %s223, 4
        %s225 = scalar_lea.vmem [#allocation7], %s224
        %v226 = vld [vmem:[%s197] sm:$0xff]
        %v227 = vld [vmem:[#allocation5] sm:$0xff]
        %v228 = vadd.f32 %v226, %v227
        %vm229 = vcmask 261120
        %v230 = vsel %vm229, %v228, 0.0
        %231 = vadd.xlane.f32.xlu0 %v230
        %v232 = vpop.xlane.xlu0 %231
        %v233 = vrcp.pop 32.0
        %v234 = vmul.f32 %v232, %v233
        %v235 = vsub.f32 %v228, %v234
        %v236 = vmul.f32 %v235, %v235
        %v237 = vsel %vm229, %v236, 0.0
        %238 = vadd.xlane.f32.xlu0 %v237
        %v239 = vpop.xlane.xlu0 %238
        %v240 = vmul.f32 %v239, %v233
        %v241 = vadd.f32 %v240, 1e-12
        %v242 = vrsqrt.pop %v241
        %v243 = vmul.f32 %v235, %v242
        %v244 = vld [vmem:[%s2] sm:$0x1]
        %v246 = vlaneseq
        %v247 = vshrl.u32 %v246, 7
        %v248 = vsub.s32 0, %v247
        %v249 = vrot.slane %v244, %v248
        %v251 = vmul.f32 %v243, %v249
        %v252 = vld [vmem:[%s3] sm:$0x1]
        %v254 = vlaneseq
        %v255 = vshrl.u32 %v254, 7
        %v256 = vsub.s32 0, %v255
        %v257 = vrot.slane %v252, %v256
        %v259 = vadd.f32 %v251, %v257
        %v260 = vpack.c.bf16 %v259, %v259
        %vm261 = vcmask 257024
        %262 = vst.msk [vmem:[%s225] sm:$0xf] %vm261, %v260
        %s263 = sand.u32 %s119, 1
        %s264 = scalar_lea.sflag [#allocation4], %s263
        %s265 = sand.u32 %s119, 1
        %s266 = smul.addr %s265, 4
        %s267 = scalar_lea.vmem [#allocation7], %s266
        // Predicated region
        $region45: #{tpu_custom_call.1} parent=35 // pred_check
          %p268 = pneg %p129
        $region46: #{tpu_custom_call.1} parent=35 // pred_check_branch
          %270 = sbr.rel (%p268) target = $region48
        $region47: #{tpu_custom_call.1} parent=35 // pred_region
          %s272 = ssub.s32 64, 64
          %273 = vsyncadd %s264, %s272
          %s274 = smul.addr %s22, 64
          %s275 = scalar_lea.hbm %s4, %s274
          %s277 = sshll.u32 %s267, 4
          %s278 = int_to_ptr.vmem [resolvable:$true] %s277
          %280 = dma.vmem_to_hbm [thread:$0]  %s278, 64, %s275, %s264
        $region48: #{tpu_custom_call.1} parent=35 // pred_fallthru
          _
      $region36: #{tpu_custom_call.1} parent=5 // pred_fallthru
        _
      %p281 = scmp.le.s32.totalorder 2, %s17
      // Predicated region
      $region49: #{tpu_custom_call.1} parent=5 // pred_check
        %p282 = pneg %p281
      $region50: #{tpu_custom_call.1} parent=5 // pred_check_branch
        %284 = sbr.rel (%p282) target = $region52
      $region51: #{tpu_custom_call.1} parent=5 // pred_region
        %s285 = ssub.s32 %s17, 2
        // Predicated region
        $region53: #{tpu_custom_call.1} parent=51 // pred_check
          %p286 = pneg %p135
        $region54: #{tpu_custom_call.1} parent=51 // pred_check_branch
          %288 = sbr.rel (%p286) target = $region56
        $region55: #{tpu_custom_call.1} parent=51 // pred_region
          %s289 = sand.u32 %s120, 1
          %s290 = scalar_lea.sflag [#allocation4], %s289
          %s291 = sand.u32 %s120, 1
          %s292 = smul.addr %s291, 4
          %s293 = scalar_lea.vmem [#allocation7], %s292
          %294 = dma.done %s290, 64
        $region56: #{tpu_custom_call.1} parent=51 // pred_fallthru
          _
      $region52: #{tpu_custom_call.1} parent=5 // pred_fallthru
        _
    $region6: #{tpu_custom_call.1} parent=1 // loop_footer
      %s21 = sadd.s32 1, %s17
    $region7: #{tpu_custom_call.1} parent=1 // loop_footer_branch
      %16 = sbr.rel target = $region3
    $region8: #{tpu_custom_call.1} parent=1 // loop_exit
      _
    %295 = vsyncpa [#allocation3], 1
    %s296 = scalar_lea.sflag [#allocation3], 1
    %297 = vsyncpa %s296, 1
    %298 = vsyncpa [#allocation6], 1
    %299 = vsyncpa [#allocation4], 1
    %s300 = scalar_lea.sflag [#allocation4], 1
    %301 = vsyncpa %s300, 1

</llo_original>
